<compile_context>
chip_gen: v5e
topology: v5e:2x2
jax: 0.10.0
libtpu: 0.0.40
codegen_flags: <defaults>
</compile_context>

<pallas_src>
import jax
import jax.numpy as jnp
from jax.experimental import pallas as pl
from jax.experimental.pallas import tpu as pltpu


def _round_up(x, m):
    return (x + m - 1) // m * m


def _cdiv(a, b):
    return (a + b - 1) // b


def critic_kernel(x_ref, w1_ref, b1_ref, w2_ref, b2_ref, o_ref):
    # x_ref:  (bm, 128)   w1_ref: (128, 64)   b1_ref: (1, 64)
    # w2_ref: (1, 64)     b2_ref: (1,) in SMEM
    # o_ref:  (bm // 128, 128)  -- lane-dense; row-major order == batch order.
    x = x_ref[...]
    # Layer 1 on the MXU with f32 accumulation.
    h = jnp.dot(x, w1_ref[...], preferred_element_type=jnp.float32)
    h = jnp.maximum(h + b1_ref[...], 0.0)                        # (bm, 64) ReLU
    # Layer 2 (64 -> 1): an N=1 matmul leaves the MXU >99% idle, so use the
    # otherwise-idle VPU/XLU slots: broadcast-multiply by the weight row and
    # reduce over the 64 feature lanes, producing a lane-dense result block.
    # The sublane->lane relayout stays hidden while the kernel is DMA-bound;
    # re-profile the bundle if tiles grow further on v7x.
    g, lanes = o_ref.shape                                       # (bm//128, 128)
    h3 = h.reshape(g, lanes, h.shape[-1])                        # leading-dim split (layout no-op)
    out = jnp.sum(h3 * w2_ref[...], axis=-1) + b2_ref[0]         # (bm//128, 128)
    o_ref[...] = out.astype(o_ref.dtype)


def critic_forward(hidden_states, inputs, params, *, bm=8192):
    """Pallas forward of CriticModel. `inputs` is unused (same as the PyTorch code)."""
    del inputs
    w1, b1, w2, b2 = params
    B, D = hidden_states.shape
    assert D == 128, "CriticModel expects 128 input features"

    x = hidden_states
    if B < 2048:
        # Small batch: a single full-array block.  Padding rows to a multiple of
        # 128 is a < 1 MiB copy, negligible at this size.
        bm_eff = _round_up(max(B, 1), 128)
        if bm_eff != B:
            x = jnp.pad(x, ((0, bm_eff - B), (0, 0)))
        grid_m = 1
    else:
        # Large batch: NO wrapper-side pad (would re-read+write all of x before a
        # bandwidth-bound kernel).  Pallas handles the ragged last input block;
        # garbage in its padded region only affects output rows we slice off.
        # bm_eff is a multiple of 1024 so the (bm_eff//128, 128) output block is
        # 8-sublane aligned; cap it at ~ceil(B/2) so there are always >= 2
        # "parallel" grid steps (both v7x TensorCores busy, pipelining restored).
        target = max(1024, _round_up(bm, 1024))
        half = max(1024, _round_up(_cdiv(B, 2), 1024))
        bm_eff = min(target, half)
        grid_m = _cdiv(B, bm_eff)

    Bp = grid_m * bm_eff  # output sizing only -- no input copy on the large path

    itemsize = jnp.dtype(hidden_states.dtype).itemsize
    cost = pl.CostEstimate(
        flops=2 * B * 128 * 64 + 2 * B * 64,
        transcendentals=0,
        bytes_accessed=B * 128 * itemsize            # x read (dominant)
        + Bp * itemsize                               # lane-dense output write
        + (128 * 64 + 64 + 64 + 1) * 4,               # resident weights/biases
    )

    out2d = pl.pallas_call(
        critic_kernel,
        out_shape=jax.ShapeDtypeStruct((Bp // 128, 128), hidden_states.dtype),
        grid=(grid_m,),
        in_specs=[
            pl.BlockSpec((bm_eff, 128), lambda i: (i, 0)),       # x: streamed batch tiles
            pl.BlockSpec((128, 64), lambda i: (0, 0)),           # W1: resident in VMEM
            pl.BlockSpec((1, 64), lambda i: (0, 0)),             # b1: resident
            pl.BlockSpec((1, 64), lambda i: (0, 0)),             # W2 row: resident
            pl.BlockSpec(memory_space=pltpu.MemorySpace.SMEM),   # b2: SMEM scalar
        ],
        out_specs=pl.BlockSpec((bm_eff // 128, 128), lambda i: (i, 0)),
        compiler_params=pltpu.CompilerParams(
            dimension_semantics=("parallel",),
        ),
        cost_estimate=cost,
    )(x, w1, b1, w2, b2)

    # Lane-dense (Bp//128, 128) block grid -> (B, 1) column; pure layout plumbing.
    return out2d.reshape(Bp, 1)[:B]


def init_params(key, dtype=jnp.float32):
    # Deterministic synthetic init (xavier-normal-like weights, zero biases).
    k1, k2 = jax.random.split(key)
    w1 = jax.random.normal(k1, (128, 64), dtype) * jnp.sqrt(2.0 / (128 + 64))  # torch W1.T
    b1 = jnp.zeros((1, 64), dtype)
    w2 = jax.random.normal(k2, (1, 64), dtype) * jnp.sqrt(2.0 / (64 + 1))      # torch W2 (1, 64)
    b2 = jnp.zeros((1,), dtype)
    return w1, b1, w2, b2


if __name__ == "__main__":
    key = jax.random.PRNGKey(0)
    k_params, k_x, k_inp = jax.random.split(key, 3)

    params = init_params(k_params)
    w1, b1, w2, b2 = params

    def ref_fn(x):
        return jnp.maximum(x @ w1 + b1, 0.0) @ w2.T + b2

    # Cover all paths: small single-block (padded), mid-size 2-step ragged
    # (no input pad), and a >2-step ragged path (exercises B > bm behaviour
    # cheaply via a small bm override).  All shapes stay tiny (<= ~1.3 MB).
    for B, bm in ((8, 8192), (2500, 8192), (2500, 1024)):
        k_x, kx = jax.random.split(k_x)
        hidden_states = jax.random.normal(kx, (B, 128), jnp.float32)
        inputs = jax.random.normal(k_inp, (B, 16), jnp.float32)  # unused, as in torch forward

        out = jax.block_until_ready(critic_forward(hidden_states, inputs, params, bm=bm))

        assert out.shape == (B, 1), (B, bm, out.shape)
        assert jnp.allclose(out, ref_fn(hidden_states), atol=1e-5, rtol=1e-5), (B, bm)

    print("KERNEL_OK")
</pallas_src>

<mosaic_0001>
module attributes {stable_mosaic.version = 11 : i64} {
  func.func @critic_kernel(%arg0: i32, %arg1: memref<128x128xf32, #tpu.memory_space<vmem>>, %arg2: memref<128x64xf32, #tpu.memory_space<vmem>>, %arg3: memref<1x64xf32, #tpu.memory_space<vmem>>, %arg4: memref<1x64xf32, #tpu.memory_space<vmem>>, %arg5: memref<1xf32, #tpu.memory_space<smem>>, %arg6: memref<1x128xf32, #tpu.memory_space<vmem>>) attributes {dimension_semantics = [#tpu.dimension_semantics<parallel>], iteration_bounds = array<i64: 1>, scalar_prefetch = 0 : i64, scratch_operands = 0 : i64, tpu.core_type = #tpu.core_type<tc>, window_params = [{transform_indices = @transform_0, window_bounds = array<i64: 128, 128>}, {pipeline_mode = #tpu.pipeline_mode<synchronous>, transform_indices = @transform_1, window_bounds = array<i64: 128, 64>}, {pipeline_mode = #tpu.pipeline_mode<synchronous>, transform_indices = @transform_2, window_bounds = array<i64: 1, 64>}, {pipeline_mode = #tpu.pipeline_mode<synchronous>, transform_indices = @transform_3, window_bounds = array<i64: 1, 64>}, {transform_indices = @transform_4, window_bounds = array<i64: 1>}, {transform_indices = @transform_5, window_bounds = array<i64: 1, 128>}]} {
    %c0 = arith.constant 0 : index
    %c0_0 = arith.constant 0 : index
    %0 = vector.load %arg1[%c0, %c0_0] : memref<128x128xf32, #tpu.memory_space<vmem>>, vector<128x128xf32>
    %c0_1 = arith.constant 0 : index
    %c0_2 = arith.constant 0 : index
    %1 = vector.load %arg2[%c0_1, %c0_2] : memref<128x64xf32, #tpu.memory_space<vmem>>, vector<128x64xf32>
    %cst = arith.constant dense<0.000000e+00> : vector<128x64xf32>
    %2 = tpu.matmul %0, %1, %cst {dimension_numbers = #tpu.dot_dimension_numbers<[1], [0], [0], [1], [0, 0, 1, 1], [], []>} : vector<128x128xf32>, vector<128x64xf32>, vector<128x64xf32> -> vector<128x64xf32>
    %c0_3 = arith.constant 0 : index
    %c0_4 = arith.constant 0 : index
    %3 = vector.load %arg3[%c0_3, %c0_4] : memref<1x64xf32, #tpu.memory_space<vmem>>, vector<1x64xf32>
    %4 = vector.broadcast %3 : vector<1x64xf32> to vector<128x64xf32>
    %5 = arith.addf %2, %4 : vector<128x64xf32>
    %cst_5 = arith.constant 0.000000e+00 : f32
    %6 = vector.broadcast %cst_5 : f32 to vector<128x64xf32>
    %7 = arith.maximumf %5, %6 : vector<128x64xf32>
    %8 = vector.shape_cast %7 : vector<128x64xf32> to vector<1x128x64xf32>
    %c0_6 = arith.constant 0 : index
    %c0_7 = arith.constant 0 : index
    %9 = vector.load %arg4[%c0_6, %c0_7] : memref<1x64xf32, #tpu.memory_space<vmem>>, vector<1x64xf32>
    %10 = vector.shape_cast %9 : vector<1x64xf32> to vector<1x1x64xf32>
    %11 = vector.broadcast %10 : vector<1x1x64xf32> to vector<1x128x64xf32>
    %12 = arith.mulf %8, %11 : vector<1x128x64xf32>
    %cst_8 = arith.constant dense<0.000000e+00> : vector<1x128xf32>
    %13 = vector.multi_reduction <add>, %12, %cst_8 [2] : vector<1x128x64xf32> to vector<1x128xf32>
    %c0_9 = arith.constant 0 : index
    %14 = memref.load %arg5[%c0_9] : memref<1xf32, #tpu.memory_space<smem>>
    %15 = vector.broadcast %14 : f32 to vector<1x128xf32>
    %16 = arith.addf %13, %15 : vector<1x128xf32>
    %c0_10 = arith.constant 0 : index
    %c0_11 = arith.constant 0 : index
    %17 = vector.load %arg6[%c0_10, %c0_11] : memref<1x128xf32, #tpu.memory_space<vmem>>, vector<1x128xf32>
    tpu.vector_store %arg6[%c0_10, %c0_11], %16 {strides = array<i32>} : memref<1x128xf32, #tpu.memory_space<vmem>>, vector<1x128xf32>,
    return
  }
  func.func @transform_0(%arg0: i32) -> (i32, i32) {
    %c0_i32 = arith.constant 0 : i32
    %c0_i32_0 = arith.constant 0 : i32
    return %arg0, %c0_i32 : i32, i32
  }
  func.func @transform_1(%arg0: i32) -> (i32, i32) {
    %c0_i32 = arith.constant 0 : i32
    %c0_i32_0 = arith.constant 0 : i32
    %c0_i32_1 = arith.constant 0 : i32
    return %c0_i32, %c0_i32_0 : i32, i32
  }
  func.func @transform_2(%arg0: i32) -> (i32, i32) {
    %c0_i32 = arith.constant 0 : i32
    %c0_i32_0 = arith.constant 0 : i32
    %c0_i32_1 = arith.constant 0 : i32
    return %c0_i32, %c0_i32_0 : i32, i32
  }
  func.func @transform_3(%arg0: i32) -> (i32, i32) {
    %c0_i32 = arith.constant 0 : i32
    %c0_i32_0 = arith.constant 0 : i32
    %c0_i32_1 = arith.constant 0 : i32
    return %c0_i32, %c0_i32_0 : i32, i32
  }
  func.func @transform_4(%arg0: i32) -> i32 {
    %c0_i32 = arith.constant 0 : i32
    %c0_i32_0 = arith.constant 0 : i32
    return %c0_i32 : i32
  }
  func.func @transform_5(%arg0: i32) -> (i32, i32) {
    %c0_i32 = arith.constant 0 : i32
    %c0_i32_0 = arith.constant 0 : i32
    return %arg0, %c0_i32 : i32, i32
  }
}

</mosaic_0001>

<llo_original>
// kernel: tpu_custom_call.1
$region0: #{tpu_custom_call.1}
  #allocation0 [shape = 'u32[]', space=smem, size = 0x4, offset = 0x4, fixed_abs, tag = 'smem constant byte address 0x4 - core index']
  #allocation1 [shape = 'u32[72,128]{1,0:T(1,128)}', space=vmem, size = 0x9000, scoped, tag = 'internal scratch']
  #allocation2 [shape = 'f32[1]{0:T(128)S(6)}', space=smem, size = 0x200, scoped, tag = 'scoped memory for tpu_custom_call.1']
  %s0 = inlined_call_operand.vmem [shape: f32[128,128], index: 0, kind: input, shape index: {}]
  %s1 = inlined_call_operand.vmem [shape: f32[128,64], index: 1, kind: input, shape index: {}]
  %s2 = inlined_call_operand.vmem [shape: f32[1,64], index: 2, kind: input, shape index: {}]
  %s3 = inlined_call_operand.vmem [shape: f32[1,64], index: 3, kind: input, shape index: {}]
  %s4 = inlined_call_operand.<no memory space> [shape: f32[1], index: 4, kind: input, shape index: {}]
  %s5 = inlined_call_operand.hbm [shape: f32[1,128], index: 5, kind: output, shape index: {}]
  %s6 = sld [smem:[#allocation0]]
  $region30: #{tpu_custom_call.1} parent=0
    _
  %s8 = ssub.s32 1, %s6
  %s9 = scalar_select 0, %s8, %s6
  %10 = sst [smem:[#allocation2]] %s4
  $region1: #{tpu_custom_call.1} parent=0
    #allocation3 [shape = 'u8[512]{0}', space=vmem, size = 0x400, scoped, tag = 'output window, operand 0, single buffered']
    #allocation4 [shape = 's32[1]{0}', space=sflag, size = 0x4, scoped, tag = 'scoped memory for tpu_custom_call.1']
    %11 = vsyncpa [#allocation4], 0
    // Predicated region
    $region2: #{tpu_custom_call.1} parent=1 // pred_check
      _
    $region3: #{tpu_custom_call.1} parent=1 // pred_check_branch
      %13 = sbr.rel (0) target = $region5
    $region4: #{tpu_custom_call.1} parent=1 // pred_region
      _
    $region5: #{tpu_custom_call.1} parent=1 // pred_fallthru
      _
    // Predicated region
    $region6: #{tpu_custom_call.1} parent=1 // pred_check
      _
    $region7: #{tpu_custom_call.1} parent=1 // pred_check_branch
      %15 = sbr.rel (0) target = $region9
    $region8: #{tpu_custom_call.1} parent=1 // pred_region
      _
    $region9: #{tpu_custom_call.1} parent=1 // pred_fallthru
      _
    // Predicated region
    $region10: #{tpu_custom_call.1} parent=1 // pred_check
      _
    $region11: #{tpu_custom_call.1} parent=1 // pred_check_branch
      %17 = sbr.rel (0) target = $region13
    $region12: #{tpu_custom_call.1} parent=1 // pred_region
      _
    $region13: #{tpu_custom_call.1} parent=1 // pred_fallthru
      _
    // Predicated region
    $region14: #{tpu_custom_call.1} parent=1 // pred_check
      _
    $region15: #{tpu_custom_call.1} parent=1 // pred_check_branch
      %19 = sbr.rel (0) target = $region17
    $region16: #{tpu_custom_call.1} parent=1 // pred_region
      _
    $region17: #{tpu_custom_call.1} parent=1 // pred_fallthru
      _
    // Predicated region
    $region18: #{tpu_custom_call.1} parent=1 // pred_check
      _
    $region19: #{tpu_custom_call.1} parent=1 // pred_check_branch
      %21 = sbr.rel (0) target = $region21
    $region20: #{tpu_custom_call.1} parent=1 // pred_region
      _
    $region21: #{tpu_custom_call.1} parent=1 // pred_fallthru
      _
    %v22 = vld [vmem:[%s0] sm:$0xff]
    %v23 = vld [vmem:[%s0 + $0x8] sm:$0xff]
    %v24 = vld [vmem:[%s0 + $0x10] sm:$0xff]
    %v25 = vld [vmem:[%s0 + $0x18] sm:$0xff]
    %v26 = vld [vmem:[%s0 + $0x20] sm:$0xff]
    %v27 = vld [vmem:[%s0 + $0x28] sm:$0xff]
    %v28 = vld [vmem:[%s0 + $0x30] sm:$0xff]
    %v29 = vld [vmem:[%s0 + $0x38] sm:$0xff]
    %v30 = vld [vmem:[%s0 + $0x40] sm:$0xff]
    %v31 = vld [vmem:[%s0 + $0x48] sm:$0xff]
    %v32 = vld [vmem:[%s0 + $0x50] sm:$0xff]
    %v33 = vld [vmem:[%s0 + $0x58] sm:$0xff]
    %v34 = vld [vmem:[%s0 + $0x60] sm:$0xff]
    %v35 = vld [vmem:[%s0 + $0x68] sm:$0xff]
    %v36 = vld [vmem:[%s0 + $0x70] sm:$0xff]
    %v37 = vld [vmem:[%s0 + $0x78] sm:$0xff]
    %v38 = vld [vmem:[%s1] sm:$0xff]
    %v39 = vld [vmem:[%s1 + $0x8] sm:$0xff]
    %v40 = vld [vmem:[%s1 + $0x10] sm:$0xff]
    %v41 = vld [vmem:[%s1 + $0x18] sm:$0xff]
    %v42 = vld [vmem:[%s1 + $0x20] sm:$0xff]
    %v43 = vld [vmem:[%s1 + $0x28] sm:$0xff]
    %v44 = vld [vmem:[%s1 + $0x30] sm:$0xff]
    %v45 = vld [vmem:[%s1 + $0x38] sm:$0xff]
    %v46 = vld [vmem:[%s1 + $0x40] sm:$0xff]
    %v47 = vld [vmem:[%s1 + $0x48] sm:$0xff]
    %v48 = vld [vmem:[%s1 + $0x50] sm:$0xff]
    %v49 = vld [vmem:[%s1 + $0x58] sm:$0xff]
    %v50 = vld [vmem:[%s1 + $0x60] sm:$0xff]
    %v51 = vld [vmem:[%s1 + $0x68] sm:$0xff]
    %v52 = vld [vmem:[%s1 + $0x70] sm:$0xff]
    %v53 = vld [vmem:[%s1 + $0x78] sm:$0xff]
    %v54 = vld [vmem:[%s2] sm:$0x1]
    %v56 = vperm.slane %v54, 0
    %58 = vmatpush.msra.mxu0 %v53
    %59 = vmatpush.msra.mxu0 %v52
    %60 = vmatpush.msra.mxu0 %v51
    %61 = vmatpush.msra.mxu0 %v50
    %62 = vmatpush.msra.mxu0 %v49
    %63 = vmatpush.msra.mxu0 %v48
    %64 = vmatpush.msra.mxu0 %v47
    %65 = vmatpush.msra.mxu0 %v46
    %66 = vmatpush.msra.mxu0 %v45
    %67 = vmatpush.msra.mxu0 %v44
    %68 = vmatpush.msra.mxu0 %v43
    %69 = vmatpush.msra.mxu0 %v42
    %70 = vmatpush.msra.mxu0 %v41
    %71 = vmatpush.msra.mxu0 %v40
    %72 = vmatpush.msra.mxu0 %v39
    %73 = vmatpush.msra.mxu0 %v38
    %74 = vmatmul.f32.gmra.mxu0 %v22
    %v75 = vpop.f32.mrf.mxu0
    %v76 = vadd.f32 %v56, %v75
    %77 = vmatmul.f32.gmra.mxu0 %v23
    %v78 = vpop.f32.mrf.mxu0
    %v79 = vadd.f32 %v56, %v78
    %80 = vmatmul.f32.gmra.mxu0 %v24
    %v81 = vpop.f32.mrf.mxu0
    %v82 = vadd.f32 %v56, %v81
    %83 = vmatmul.f32.gmra.mxu0 %v25
    %v84 = vpop.f32.mrf.mxu0
    %v85 = vadd.f32 %v56, %v84
    %86 = vmatmul.f32.gmra.mxu0 %v26
    %v87 = vpop.f32.mrf.mxu0
    %v88 = vadd.f32 %v56, %v87
    %89 = vmatmul.f32.gmra.mxu0 %v27
    %v90 = vpop.f32.mrf.mxu0
    %v91 = vadd.f32 %v56, %v90
    %92 = vmatmul.f32.gmra.mxu0 %v28
    %v93 = vpop.f32.mrf.mxu0
    %v94 = vadd.f32 %v56, %v93
    %95 = vmatmul.f32.gmra.mxu0 %v29
    %v96 = vpop.f32.mrf.mxu0
    %v97 = vadd.f32 %v56, %v96
    %98 = vmatmul.f32.gmra.mxu0 %v30
    %v99 = vpop.f32.mrf.mxu0
    %v100 = vadd.f32 %v56, %v99
    %101 = vmatmul.f32.gmra.mxu0 %v31
    %v102 = vpop.f32.mrf.mxu0
    %v103 = vadd.f32 %v56, %v102
    %104 = vmatmul.f32.gmra.mxu0 %v32
    %v105 = vpop.f32.mrf.mxu0
    %v106 = vadd.f32 %v56, %v105
    %107 = vmatmul.f32.gmra.mxu0 %v33
    %v108 = vpop.f32.mrf.mxu0
    %v109 = vadd.f32 %v56, %v108
    %110 = vmatmul.f32.gmra.mxu0 %v34
    %v111 = vpop.f32.mrf.mxu0
    %v112 = vadd.f32 %v56, %v111
    %113 = vmatmul.f32.gmra.mxu0 %v35
    %v114 = vpop.f32.mrf.mxu0
    %v115 = vadd.f32 %v56, %v114
    %116 = vmatmul.f32.gmra.mxu0 %v36
    %v117 = vpop.f32.mrf.mxu0
    %v118 = vadd.f32 %v56, %v117
    %119 = vmatmul.f32.gmra.mxu0 %v37
    %v120 = vpop.f32.mrf.mxu0
    %v121 = vadd.f32 %v56, %v120
    %122 = vdwg.mxu0
    %v123 = vmax.f32 %v76, 0.0
    %v124 = vmax.f32 %v79, 0.0
    %v125 = vmax.f32 %v82, 0.0
    %v126 = vmax.f32 %v85, 0.0
    %v127 = vmax.f32 %v88, 0.0
    %v128 = vmax.f32 %v91, 0.0
    %v129 = vmax.f32 %v94, 0.0
    %v130 = vmax.f32 %v97, 0.0
    %v131 = vmax.f32 %v100, 0.0
    %v132 = vmax.f32 %v103, 0.0
    %v133 = vmax.f32 %v106, 0.0
    %v134 = vmax.f32 %v109, 0.0
    %v135 = vmax.f32 %v112, 0.0
    %v136 = vmax.f32 %v115, 0.0
    %v137 = vmax.f32 %v118, 0.0
    %v138 = vmax.f32 %v121, 0.0
    %v139 = vld [vmem:[%s3] sm:$0x1]
    %v141 = vperm.slane %v139, 0
    %v143 = vmul.f32 %v123, %v141
    %v144 = vmul.f32 %v124, %v141
    %v145 = vmul.f32 %v125, %v141
    %v146 = vmul.f32 %v126, %v141
    %v147 = vmul.f32 %v127, %v141
    %v148 = vmul.f32 %v128, %v141
    %v149 = vmul.f32 %v129, %v141
    %v150 = vmul.f32 %v130, %v141
    %v151 = vmul.f32 %v131, %v141
    %v152 = vmul.f32 %v132, %v141
    %v153 = vmul.f32 %v133, %v141
    %v154 = vmul.f32 %v134, %v141
    %v155 = vmul.f32 %v135, %v141
    %v156 = vmul.f32 %v136, %v141
    %v157 = vmul.f32 %v137, %v141
    %v158 = vmul.f32 %v138, %v141
    %vm159 = vcmask 523264
    %v160 = vsel %vm159, %v143, 0.0
    %161 = vadd.xlane.f32.xlu0 %v160
    %v162 = vpop.xlane.xlu0 %161
    %v163 = vsel %vm159, %v144, 0.0
    %164 = vadd.xlane.f32.xlu0 %v163
    %v165 = vpop.xlane.xlu0 %164
    %v166 = vsel %vm159, %v145, 0.0
    %167 = vadd.xlane.f32.xlu0 %v166
    %v168 = vpop.xlane.xlu0 %167
    %v169 = vsel %vm159, %v146, 0.0
    %170 = vadd.xlane.f32.xlu0 %v169
    %v171 = vpop.xlane.xlu0 %170
    %v172 = vsel %vm159, %v147, 0.0
    %173 = vadd.xlane.f32.xlu0 %v172
    %v174 = vpop.xlane.xlu0 %173
    %v175 = vsel %vm159, %v148, 0.0
    %176 = vadd.xlane.f32.xlu0 %v175
    %v177 = vpop.xlane.xlu0 %176
    %v178 = vsel %vm159, %v149, 0.0
    %179 = vadd.xlane.f32.xlu0 %v178
    %v180 = vpop.xlane.xlu0 %179
    %v181 = vsel %vm159, %v150, 0.0
    %182 = vadd.xlane.f32.xlu0 %v181
    %v183 = vpop.xlane.xlu0 %182
    %v184 = vsel %vm159, %v151, 0.0
    %185 = vadd.xlane.f32.xlu0 %v184
    %v186 = vpop.xlane.xlu0 %185
    %v187 = vsel %vm159, %v152, 0.0
    %188 = vadd.xlane.f32.xlu0 %v187
    %v189 = vpop.xlane.xlu0 %188
    %v190 = vsel %vm159, %v153, 0.0
    %191 = vadd.xlane.f32.xlu0 %v190
    %v192 = vpop.xlane.xlu0 %191
    %v193 = vsel %vm159, %v154, 0.0
    %194 = vadd.xlane.f32.xlu0 %v193
    %v195 = vpop.xlane.xlu0 %194
    %v196 = vsel %vm159, %v155, 0.0
    %197 = vadd.xlane.f32.xlu0 %v196
    %v198 = vpop.xlane.xlu0 %197
    %v199 = vsel %vm159, %v156, 0.0
    %200 = vadd.xlane.f32.xlu0 %v199
    %v201 = vpop.xlane.xlu0 %200
    %v202 = vsel %vm159, %v157, 0.0
    %203 = vadd.xlane.f32.xlu0 %v202
    %v204 = vpop.xlane.xlu0 %203
    %v205 = vsel %vm159, %v158, 0.0
    %206 = vadd.xlane.f32.xlu0 %v205
    %v207 = vpop.xlane.xlu0 %206
    %s208 = sld [smem:[#allocation2]]
    %v209 = vstv %s208
    %v210 = vadd.f32 %v162, %v209
    %v211 = vadd.f32 %v165, %v209
    %v212 = vadd.f32 %v168, %v209
    %v213 = vadd.f32 %v171, %v209
    %v214 = vadd.f32 %v174, %v209
    %v215 = vadd.f32 %v177, %v209
    %v216 = vadd.f32 %v180, %v209
    %v217 = vadd.f32 %v183, %v209
    %v218 = vadd.f32 %v186, %v209
    %v219 = vadd.f32 %v189, %v209
    %v220 = vadd.f32 %v192, %v209
    %v221 = vadd.f32 %v195, %v209
    %v222 = vadd.f32 %v198, %v209
    %v223 = vadd.f32 %v201, %v209
    %v224 = vadd.f32 %v204, %v209
    %v225 = vadd.f32 %v207, %v209
    %v242 = vlaneseq
    %v243 = vand.u32 %v242, 127
    %v244 = vperm.slane %v210, %v243
    %v245 = vadd.s32 %v243, 4294967288
    %v246 = vperm.slane %v211, %v245
    %vm247 = vcmask 130112
    %v248 = vsel %vm247, %v246, %v244
    %v249 = vadd.s32 %v243, 4294967280
    %v250 = vperm.slane %v212, %v249
    %vm251 = vcmask 195712
    %v252 = vsel %vm251, %v250, %v248
    %v253 = vadd.s32 %v243, 4294967272
    %v254 = vperm.slane %v213, %v253
    %vm255 = vcmask 261312
    %v256 = vsel %vm255, %v254, %v252
    %v257 = vadd.s32 %v243, 4294967264
    %v258 = vperm.slane %v214, %v257
    %vm259 = vcmask 326912
    %v260 = vsel %vm259, %v258, %v256
    %v261 = vadd.s32 %v243, 4294967256
    %v262 = vperm.slane %v215, %v261
    %vm263 = vcmask 392512
    %v264 = vsel %vm263, %v262, %v260
    %v265 = vadd.s32 %v243, 4294967248
    %v266 = vperm.slane %v216, %v265
    %vm267 = vcmask 458112
    %v268 = vsel %vm267, %v266, %v264
    %v269 = vadd.s32 %v243, 4294967240
    %v270 = vperm.slane %v217, %v269
    %vm271 = vcmask 523712
    %v272 = vsel %vm271, %v270, %v268
    %v273 = vadd.s32 %v243, 4294967232
    %v274 = vperm.slane %v218, %v273
    %vm275 = vcmask 589312
    %v276 = vsel %vm275, %v274, %v272
    %v277 = vadd.s32 %v243, 4294967224
    %v278 = vperm.slane %v219, %v277
    %vm279 = vcmask 654912
    %v280 = vsel %vm279, %v278, %v276
    %v281 = vadd.s32 %v243, 4294967216
    %v282 = vperm.slane %v220, %v281
    %vm283 = vcmask 720512
    %v284 = vsel %vm283, %v282, %v280
    %v285 = vadd.s32 %v243, 4294967208
    %v286 = vperm.slane %v221, %v285
    %vm287 = vcmask 786112
    %v288 = vsel %vm287, %v286, %v284
    %v289 = vadd.s32 %v243, 4294967200
    %v290 = vperm.slane %v222, %v289
    %vm291 = vcmask 851712
    %v292 = vsel %vm291, %v290, %v288
    %v293 = vadd.s32 %v243, 4294967192
    %v294 = vperm.slane %v223, %v293
    %vm295 = vcmask 917312
    %v296 = vsel %vm295, %v294, %v292
    %v297 = vadd.s32 %v243, 4294967184
    %v298 = vperm.slane %v224, %v297
    %vm299 = vcmask 982912
    %v300 = vsel %vm299, %v298, %v296
    %v301 = vadd.s32 %v243, 4294967176
    %v302 = vperm.slane %v225, %v301
    %vm303 = vcmask 1048512
    %v304 = vsel %vm303, %v302, %v300
    %306 = vst [vmem:[#allocation3] sm:$0x1] %v304
    // Predicated region
    $region22: #{tpu_custom_call.1} parent=1 // pred_check
      _
    $region23: #{tpu_custom_call.1} parent=1 // pred_check_branch
      %308 = sbr.rel (0) target = $region25
    $region24: #{tpu_custom_call.1} parent=1 // pred_region
      %310 = vsyncadd [#allocation4], 0
      %s312 = sshll.u32 [#allocation3], 4
      %s313 = int_to_ptr.vmem [resolvable:$true] %s312
      %s314 = sshll.u32 %s5, 4
      %s315 = int_to_ptr.hbm [resolvable:$true] %s314
      %317 = dma.vmem_to_hbm [thread:$0]  %s313, 16, %s315, [#allocation4]
    $region25: #{tpu_custom_call.1} parent=1 // pred_fallthru
      _
    // Predicated region
    $region26: #{tpu_custom_call.1} parent=1 // pred_check
      _
    $region27: #{tpu_custom_call.1} parent=1 // pred_check_branch
      %319 = sbr.rel (0) target = $region29
    $region28: #{tpu_custom_call.1} parent=1 // pred_region
      %321 = dma.done [#allocation4], 16
    $region29: #{tpu_custom_call.1} parent=1 // pred_fallthru
      _
    %322 = vsyncpa [#allocation4], 1

</llo_original>
